<compile_context>
chip_gen: v7x
topology: tpu7x:2x2x1
jax: 0.10.0
libtpu: 0.0.40
codegen_flags: <defaults>
</compile_context>

<pallas_src>
import functools

import jax
import jax.numpy as jnp
from jax.experimental import pallas as pl
from jax.experimental.pallas import tpu as pltpu


def _round_up(x: int, m: int) -> int:
    return (x + m - 1) // m * m


def _lane_pad(d: int) -> int:
    # 256-align large dims (v6e/v7x MXU passes are 256 wide); 128 otherwise.
    return _round_up(d, 256) if d >= 256 else _round_up(d, 128)


def _vmem_capacity_bytes() -> int:
    try:
        return int(pltpu.get_tpu_info().vmem_capacity_bytes)
    except Exception:
        return 64 << 20  # conservative fallback (v7x); v5e/v6e have 128 MiB


def _policy_head_kernel(x_ref, w1_ref, b1_ref, w2_ref, b2_ref, o_ref):
    # fc1: [TM, E] @ [E, Hp] with bf16 operands, f32 accumulation; + b1; ReLU.
    x = x_ref[...].astype(w1_ref.dtype)
    h = jnp.dot(x, w1_ref[...], preferred_element_type=jnp.float32)
    h = jnp.maximum(h + b1_ref[...], 0.0)
    # fc2: [TM, Hp] @ [Hp, Ap]; + b2.  Padded hidden rows of w2 are zero, so
    # the padded (zero) hidden activations contribute nothing.
    out = jnp.dot(h.astype(w2_ref.dtype), w2_ref[...],
                  preferred_element_type=jnp.float32)
    o_ref[...] = (out + b2_ref[...]).astype(o_ref.dtype)


def prepare_policy_head_params(w1, b1, w2, b2, *, weight_dtype=jnp.bfloat16):
    """Pad (H, A -> lane multiples) and cast PolicyHead parameters ONCE.

    w1: [E, H], b1: [H], w2: [H, A], b2: [A]   (torch fc.weight.T layout).
    Call at init, not per forward.  Padding is exact: padded hidden units are
    relu(0 + 0) = 0 and multiply zero rows of w2; padded action columns are
    sliced off by the apply function.
    """
    E, H = w1.shape
    H2, A = w2.shape
    assert H == H2 and b1.shape == (H,) and b2.shape == (A,)
    Hp, Ap = _lane_pad(H), _lane_pad(A)
    w1p = jnp.zeros((E, Hp), weight_dtype).at[:, :H].set(w1.astype(weight_dtype))
    w2p = jnp.zeros((Hp, Ap), weight_dtype).at[:H, :A].set(w2.astype(weight_dtype))
    # Biases stay f32 (tiny) and are added to the f32 accumulator.
    b1p = jnp.zeros((1, Hp), jnp.float32).at[0, :H].set(b1.astype(jnp.float32))
    b2p = jnp.zeros((1, Ap), jnp.float32).at[0, :A].set(b2.astype(jnp.float32))
    return w1p, b1p, w2p, b2p


@functools.partial(jax.jit, static_argnames=("num_actions",))
def policy_head_apply(x, w1p, b1p, w2p, b2p, *, num_actions):
    """y = relu(x @ w1 + b1) @ w2 + b2, sliced back to [B, num_actions]."""
    B, E = x.shape
    E_w, Hp = w1p.shape
    Hp2, Ap = w2p.shape
    assert E == E_w and Hp == Hp2

    # Batch tiling: minimize padding; >= 2 tiles once B >= 16 so the "parallel"
    # axis can shard across v7x's two TensorCores.
    nb = -(-B // 512)
    if B >= 16:
        nb = max(nb, 2)
    if nb == 1:
        TM, Bp = B, B            # full-dim block: no sublane constraint, no padding
    else:
        TM = _round_up(-(-B // nb), 8)
        Bp = nb * TM
    xp = x if Bp == B else jnp.zeros((Bp, E), x.dtype).at[:B, :].set(x)

    # VMEM budget: double-buffered x/out tiles, resident weights, f32 h.
    wbytes_each = jnp.dtype(w1p.dtype).itemsize
    xbytes = jnp.dtype(x.dtype).itemsize
    weight_bytes = (E * Hp + Hp * Ap) * wbytes_each
    single_buffer_weights = weight_bytes >= (8 << 20)
    w_kwargs = {"pipeline_mode": pl.Buffered(1)} if single_buffer_weights else {}
    n_wbuf = 1 if single_buffer_weights else 2
    vmem_est = (2 * TM * E * xbytes                  # x tiles (double-buffered)
                + 2 * TM * Ap * xbytes               # out tiles
                + n_wbuf * weight_bytes              # resident weights
                + 2 * (Hp + Ap) * 4                  # biases
                + TM * Hp * 4 + TM * (E + Hp) * 2)   # f32 h + bf16 casts
    cap = _vmem_capacity_bytes()
    vmem_limit = int(min(max(vmem_est + (4 << 20), 32 << 20), int(cap * 0.9)))
    # NOTE: if weight_bytes alone approaches the chip's VMEM capacity (possible
    # for very large E/H on v7x's 64 MiB), this head should switch to K-tiling
    # the fc1 contraction with an f32 accumulator scratch instead of keeping
    # both weight matrices resident.  Not needed at PolicyHead-typical sizes.

    cost = pl.CostEstimate(
        flops=2 * Bp * (E * Hp + Hp * Ap),
        transcendentals=0,
        bytes_accessed=(B * E * xbytes + weight_bytes + (Hp + Ap) * 4
                        + Bp * Ap * xbytes),
    )

    out_p = pl.pallas_call(
        _policy_head_kernel,
        out_shape=jax.ShapeDtypeStruct((Bp, Ap), x.dtype),
        grid=(nb,),
        in_specs=[
            pl.BlockSpec((TM, E), lambda i: (i, 0)),               # x (pipelined)
            pl.BlockSpec((E, Hp), lambda i: (0, 0), **w_kwargs),   # w1 resident
            pl.BlockSpec((1, Hp), lambda i: (0, 0), **w_kwargs),   # b1 resident
            pl.BlockSpec((Hp, Ap), lambda i: (0, 0), **w_kwargs),  # w2 resident
            pl.BlockSpec((1, Ap), lambda i: (0, 0), **w_kwargs),   # b2 resident
        ],
        out_specs=pl.BlockSpec((TM, Ap), lambda i: (i, 0)),        # lane-dense out
        compiler_params=pltpu.CompilerParams(
            dimension_semantics=("parallel",),   # shards batch tiles on v7x's 2 TCs
            vmem_limit_bytes=vmem_limit,
        ),
        cost_estimate=cost,
    )(xp, w1p, b1p, w2p, b2p)

    return out_p[:B, :num_actions]


if __name__ == "__main__":
    # Small shapes consistent with PolicyHead(num_actions, embed_dim, hidden_dim).
    batch = 8
    embed_dim = 32
    hidden_dim = 32
    num_actions = 16

    key = jax.random.PRNGKey(0)
    kx, k1, kb1, k2, kb2 = jax.random.split(key, 5)

    x = jax.random.normal(kx, (batch, embed_dim), dtype=jnp.float32)
    # Params in x @ W layout (torch nn.Linear weight is [out, in]; pass weight.T).
    w1 = jax.random.normal(k1, (embed_dim, hidden_dim), dtype=jnp.float32) * 0.1
    b1 = jax.random.normal(kb1, (hidden_dim,), dtype=jnp.float32) * 0.1
    w2 = jax.random.normal(k2, (hidden_dim, num_actions), dtype=jnp.float32) * 0.1
    b2 = jax.random.normal(kb2, (num_actions,), dtype=jnp.float32) * 0.1

    # Pad + cast parameters once (init time), then run the jitted apply.
    w1p, b1p, w2p, b2p = prepare_policy_head_params(w1, b1, w2, b2)
    out = policy_head_apply(x, w1p, b1p, w2p, b2p, num_actions=num_actions)
    out = jax.block_until_ready(out)

    # fp32 reference for the module semantics.  The kernel uses bf16 MXU
    # operands with f32 accumulation, hence the loosened tolerance (explicit
    # decision per review).
    ref = jnp.maximum(x @ w1 + b1, 0.0) @ w2 + b2
    assert out.shape == (batch, num_actions)
    assert jnp.allclose(out, ref, atol=3e-2, rtol=3e-2), \
        float(jnp.max(jnp.abs(out - ref)))

    print("KERNEL_OK")
</pallas_src>

<mosaic_0001>
module attributes {stable_mosaic.version = 11 : i64} {
  func.func @_policy_head_kernel(%arg0: i32, %arg1: memref<8x32xf32, #tpu.memory_space<vmem>>, %arg2: memref<32x128xbf16, #tpu.memory_space<vmem>>, %arg3: memref<1x128xf32, #tpu.memory_space<vmem>>, %arg4: memref<128x128xbf16, #tpu.memory_space<vmem>>, %arg5: memref<1x128xf32, #tpu.memory_space<vmem>>, %arg6: memref<8x128xf32, #tpu.memory_space<vmem>>) attributes {dimension_semantics = [#tpu.dimension_semantics<parallel>], iteration_bounds = array<i64: 1>, scalar_prefetch = 0 : i64, scratch_operands = 0 : i64, tpu.core_type = #tpu.core_type<tc>, window_params = [{transform_indices = @transform_0, window_bounds = array<i64: 8, 32>}, {pipeline_mode = #tpu.pipeline_mode<synchronous>, transform_indices = @transform_1, window_bounds = array<i64: 32, 128>}, {pipeline_mode = #tpu.pipeline_mode<synchronous>, transform_indices = @transform_2, window_bounds = array<i64: 1, 128>}, {pipeline_mode = #tpu.pipeline_mode<synchronous>, transform_indices = @transform_3, window_bounds = array<i64: 128, 128>}, {pipeline_mode = #tpu.pipeline_mode<synchronous>, transform_indices = @transform_4, window_bounds = array<i64: 1, 128>}, {transform_indices = @transform_5, window_bounds = array<i64: 8, 128>}]} {
    %c0 = arith.constant 0 : index
    %c0_0 = arith.constant 0 : index
    %0 = vector.load %arg1[%c0, %c0_0] : memref<8x32xf32, #tpu.memory_space<vmem>>, vector<8x32xf32>
    %1 = arith.truncf %0 : vector<8x32xf32> to vector<8x32xbf16>
    %c0_1 = arith.constant 0 : index
    %c0_2 = arith.constant 0 : index
    %2 = vector.load %arg2[%c0_1, %c0_2] : memref<32x128xbf16, #tpu.memory_space<vmem>>, vector<32x128xbf16>
    %cst = arith.constant dense<0.000000e+00> : vector<8x128xf32>
    %3 = tpu.matmul %1, %2, %cst {dimension_numbers = #tpu.dot_dimension_numbers<[1], [0], [0], [1], [0, 0, 1, 1], [], []>} : vector<8x32xbf16>, vector<32x128xbf16>, vector<8x128xf32> -> vector<8x128xf32>
    %c0_3 = arith.constant 0 : index
    %c0_4 = arith.constant 0 : index
    %4 = vector.load %arg3[%c0_3, %c0_4] : memref<1x128xf32, #tpu.memory_space<vmem>>, vector<1x128xf32>
    %5 = vector.broadcast %4 : vector<1x128xf32> to vector<8x128xf32>
    %6 = arith.addf %3, %5 : vector<8x128xf32>
    %cst_5 = arith.constant 0.000000e+00 : f32
    %7 = vector.broadcast %cst_5 : f32 to vector<8x128xf32>
    %8 = arith.maximumf %6, %7 : vector<8x128xf32>
    %9 = arith.truncf %8 : vector<8x128xf32> to vector<8x128xbf16>
    %c0_6 = arith.constant 0 : index
    %c0_7 = arith.constant 0 : index
    %10 = vector.load %arg4[%c0_6, %c0_7] : memref<128x128xbf16, #tpu.memory_space<vmem>>, vector<128x128xbf16>
    %cst_8 = arith.constant dense<0.000000e+00> : vector<8x128xf32>
    %11 = tpu.matmul %9, %10, %cst_8 {dimension_numbers = #tpu.dot_dimension_numbers<[1], [0], [0], [1], [0, 0, 1, 1], [], []>} : vector<8x128xbf16>, vector<128x128xbf16>, vector<8x128xf32> -> vector<8x128xf32>
    %c0_9 = arith.constant 0 : index
    %c0_10 = arith.constant 0 : index
    %12 = vector.load %arg5[%c0_9, %c0_10] : memref<1x128xf32, #tpu.memory_space<vmem>>, vector<1x128xf32>
    %13 = vector.broadcast %12 : vector<1x128xf32> to vector<8x128xf32>
    %14 = arith.addf %11, %13 : vector<8x128xf32>
    %c0_11 = arith.constant 0 : index
    %c0_12 = arith.constant 0 : index
    %15 = vector.load %arg6[%c0_11, %c0_12] : memref<8x128xf32, #tpu.memory_space<vmem>>, vector<8x128xf32>
    tpu.vector_store %arg6[%c0_11, %c0_12], %14 {strides = array<i32>} : memref<8x128xf32, #tpu.memory_space<vmem>>, vector<8x128xf32>,
    return
  }
  func.func @transform_0(%arg0: i32) -> (i32, i32) {
    %c0_i32 = arith.constant 0 : i32
    %c0_i32_0 = arith.constant 0 : i32
    return %arg0, %c0_i32 : i32, i32
  }
  func.func @transform_1(%arg0: i32) -> (i32, i32) {
    %c0_i32 = arith.constant 0 : i32
    %c0_i32_0 = arith.constant 0 : i32
    %c0_i32_1 = arith.constant 0 : i32
    return %c0_i32, %c0_i32_0 : i32, i32
  }
  func.func @transform_2(%arg0: i32) -> (i32, i32) {
    %c0_i32 = arith.constant 0 : i32
    %c0_i32_0 = arith.constant 0 : i32
    %c0_i32_1 = arith.constant 0 : i32
    return %c0_i32, %c0_i32_0 : i32, i32
  }
  func.func @transform_3(%arg0: i32) -> (i32, i32) {
    %c0_i32 = arith.constant 0 : i32
    %c0_i32_0 = arith.constant 0 : i32
    %c0_i32_1 = arith.constant 0 : i32
    return %c0_i32, %c0_i32_0 : i32, i32
  }
  func.func @transform_4(%arg0: i32) -> (i32, i32) {
    %c0_i32 = arith.constant 0 : i32
    %c0_i32_0 = arith.constant 0 : i32
    %c0_i32_1 = arith.constant 0 : i32
    return %c0_i32, %c0_i32_0 : i32, i32
  }
  func.func @transform_5(%arg0: i32) -> (i32, i32) {
    %c0_i32 = arith.constant 0 : i32
    %c0_i32_0 = arith.constant 0 : i32
    return %arg0, %c0_i32 : i32, i32
  }
}

</mosaic_0001>

<llo_original>
// kernel: policy_head_apply.1
$region0: #{policy_head_apply.1}
  #allocation0 [shape = 'u32[]', space=smem, size = 0x4, offset = 0x4, fixed_abs, tag = 'smem constant byte address 0x4 - core index']
  #allocation1 [shape = 'u32[144,128]{1,0:T(1,128)}', space=vmem, size = 0x12000, scoped, tag = 'internal scratch']
  %s0 = inlined_call_operand.hbm [shape: f32[8,32], index: 0, kind: input, shape index: {}]
  %s1 = inlined_call_operand.hbm [shape: bf16[32,128], index: 1, kind: input, shape index: {}]
  %s2 = inlined_call_operand.vmem [shape: f32[1,128], index: 2, kind: input, shape index: {}]
  %s3 = inlined_call_operand.hbm [shape: bf16[128,128], index: 3, kind: input, shape index: {}]
  %s4 = inlined_call_operand.vmem [shape: f32[1,128], index: 4, kind: input, shape index: {}]
  %s5 = inlined_call_operand.hbm [shape: f32[8,128], index: 5, kind: output, shape index: {}]
  %s6 = sld [smem:[#allocation0]]
  $region42: #{policy_head_apply.1} parent=0
    _
  %s8 = ssub.s32 1, %s6
  %s9 = scalar_select 0, %s8, %s6
  $region1: #{policy_head_apply.1} parent=0
    #allocation2 [shape = 'u8[4096]{0}', space=vmem, size = 0x1000, scoped, tag = 'input window, operand 0, single buffered']
    #allocation3 [shape = 's32[1]{0}', space=sflag, size = 0x4, scoped, tag = 'scoped memory for policy_head_apply.1']
    #allocation4 [shape = 's32[1]{0}', space=sflag, size = 0x4, scoped, tag = 'scoped memory for policy_head_apply.1']
    #allocation5 [shape = 'u8[8192]{0}', space=vmem, size = 0x2000, scoped, tag = 'input window, operand 1, single buffered']
    #allocation6 [shape = 's32[1]{0}', space=sflag, size = 0x4, scoped, tag = 'scoped memory for policy_head_apply.1']
    #allocation7 [shape = 'u8[32768]{0}', space=vmem, size = 0x8000, scoped, tag = 'input window, operand 3, single buffered']
    #allocation8 [shape = 'u8[4096]{0}', space=vmem, size = 0x1000, scoped, tag = 'output window, operand 0, single buffered']
    %10 = vsyncpa [#allocation3], 0
    %11 = vsyncpa [#allocation6], 0
    %12 = vsyncpa [#allocation4], 0
    // Predicated region
    $region2: #{policy_head_apply.1} parent=1 // pred_check
      _
    $region3: #{policy_head_apply.1} parent=1 // pred_check_branch
      %14 = sbr.rel (0) target = $region5
    $region4: #{policy_head_apply.1} parent=1 // pred_region
      %s16 = ssub.s32 128, 128
      %17 = vsyncadd [#allocation3], %s16
      %s19 = sshll.u32 [#allocation2], 4
      %s20 = int_to_ptr.vmem [resolvable:$true] %s19
      %22 = dma.hbm_to_vmem [thread:$0]  %s0, 128, %s20, [#allocation3]
    $region5: #{policy_head_apply.1} parent=1 // pred_fallthru
      _
    // Predicated region
    $region6: #{policy_head_apply.1} parent=1 // pred_check
      _
    $region7: #{policy_head_apply.1} parent=1 // pred_check_branch
      %24 = sbr.rel (0) target = $region9
    $region8: #{policy_head_apply.1} parent=1 // pred_region
      %s26 = ssub.s32 256, 256
      %27 = vsyncadd [#allocation6], %s26
      %s28 = sshll.u32 [#allocation5], 4
      %s29 = int_to_ptr.vmem [resolvable:$true] %s28
      %34 = dma.hbm_to_vmem [thread:$0]  %s1, 256, %s29, [#allocation6], 64, 64, 4
    $region9: #{policy_head_apply.1} parent=1 // pred_fallthru
      _
    // Predicated region
    $region10: #{policy_head_apply.1} parent=1 // pred_check
      _
    $region11: #{policy_head_apply.1} parent=1 // pred_check_branch
      %36 = sbr.rel (0) target = $region13
    $region12: #{policy_head_apply.1} parent=1 // pred_region
      _
    $region13: #{policy_head_apply.1} parent=1 // pred_fallthru
      _
    // Predicated region
    $region14: #{policy_head_apply.1} parent=1 // pred_check
      _
    $region15: #{policy_head_apply.1} parent=1 // pred_check_branch
      %38 = sbr.rel (0) target = $region17
    $region16: #{policy_head_apply.1} parent=1 // pred_region
      %s40 = ssub.s32 1024, 1024
      %41 = vsyncadd [#allocation6], %s40
      %s42 = sshll.u32 [#allocation7], 4
      %s43 = int_to_ptr.vmem [resolvable:$true] %s42
      %48 = dma.hbm_to_vmem [thread:$0]  %s3, 1024, %s43, [#allocation6], 64, 64, 4
    $region17: #{policy_head_apply.1} parent=1 // pred_fallthru
      _
    // Predicated region
    $region18: #{policy_head_apply.1} parent=1 // pred_check
      _
    $region19: #{policy_head_apply.1} parent=1 // pred_check_branch
      %50 = sbr.rel (0) target = $region21
    $region20: #{policy_head_apply.1} parent=1 // pred_region
      _
    $region21: #{policy_head_apply.1} parent=1 // pred_fallthru
      _
    // Predicated region
    $region22: #{policy_head_apply.1} parent=1 // pred_check
      _
    $region23: #{policy_head_apply.1} parent=1 // pred_check_branch
      %52 = sbr.rel (0) target = $region25
    $region24: #{policy_head_apply.1} parent=1 // pred_region
      %53 = dma.done [#allocation3], 128
    $region25: #{policy_head_apply.1} parent=1 // pred_fallthru
      _
    // Predicated region
    $region26: #{policy_head_apply.1} parent=1 // pred_check
      _
    $region27: #{policy_head_apply.1} parent=1 // pred_check_branch
      %55 = sbr.rel (0) target = $region29
    $region28: #{policy_head_apply.1} parent=1 // pred_region
      %56 = dma.done [#allocation6], 256
    $region29: #{policy_head_apply.1} parent=1 // pred_fallthru
      _
    // Predicated region
    $region30: #{policy_head_apply.1} parent=1 // pred_check
      _
    $region31: #{policy_head_apply.1} parent=1 // pred_check_branch
      %58 = sbr.rel (0) target = $region33
    $region32: #{policy_head_apply.1} parent=1 // pred_region
      %59 = dma.done [#allocation6], 1024
    $region33: #{policy_head_apply.1} parent=1 // pred_fallthru
      _
    %v61 = vld [vmem:[#allocation2] sm:$0xff]
    %v62 = vpack.c.bf16 %v61, %v61
    %v63 = vld [vmem:[#allocation5] sm:$0xf]
    %v64 = vld [vmem:[#allocation5 + $0x4] sm:$0xf]
    %v65 = vld [vmem:[#allocation5 + $0x8] sm:$0xf]
    %v66 = vld [vmem:[#allocation5 + $0xc] sm:$0xf]
    %v67 = vld [vmem:[%s2] sm:$0x1]
    %v69 = vlaneseq
    %v70 = vshrl.u32 %v69, 7
    %v71 = vsub.s32 0, %v70
    %v72 = vrot.slane %v67, %v71
    %v78 = vunpack.c.l.b16 %v63
    %v79 = vunpack.c.l.b16 %v64
    %v80 = vunpack.c.l.b16 %v65
    %v81 = vunpack.c.l.b16 %v66
    %v82 = vpack.c.b16 %v79, %v78
    %v83 = vpack.c.b16 %v81, %v80
    %vm86 = vcmask 261120
    %v88 = vsel %vm86, %v62, 0
    %90 = vmatprep.subr.bf16.mxu0 0
    %91 = vmatpush1.bf16.msra.mxu0 %v82
    %92 = vmatprep.subr.bf16.mxu0 0
    %93 = vmatpush1.bf16.msra.mxu0 %v83
    %94 = vmatprep.subr.bf16.mxu0 0
    %95 = vmatpush1.bf16.msra.mxu0 0
    %96 = vmatprep.subr.bf16.mxu0 0
    %97 = vmatpush1.bf16.msra.mxu0 0
    %98 = vmatprep.subr.bf16.mxu0 0
    %99 = vmatpush1.bf16.msra.mxu0 0
    %100 = vmatprep.subr.bf16.mxu0 0
    %101 = vmatpush1.bf16.msra.mxu0 0
    %102 = vmatprep.subr.bf16.mxu0 0
    %103 = vmatpush1.bf16.msra.mxu0 0
    %104 = vmatprep.subr.bf16.mxu0 0
    %105 = vmatpush1.bf16.msra.mxu0 0
    %106 = vmatprep.subr.bf16.mxu0 0
    %107 = vmatpush1.bf16.msra.mxu0 0
    %108 = vmatprep.subr.bf16.mxu0 0
    %109 = vmatpush1.bf16.msra.mxu0 0
    %110 = vmatprep.subr.bf16.mxu0 0
    %111 = vmatpush1.bf16.msra.mxu0 0
    %112 = vmatprep.subr.bf16.mxu0 0
    %113 = vmatpush1.bf16.msra.mxu0 0
    %114 = vmatprep.subr.bf16.mxu0 0
    %115 = vmatpush1.bf16.msra.mxu0 0
    %116 = vmatprep.subr.bf16.mxu0 0
    %117 = vmatpush1.bf16.msra.mxu0 0
    %118 = vmatprep.subr.bf16.mxu0 0
    %119 = vmatpush1.bf16.msra.mxu0 0
    %120 = vmatprep.subr.bf16.mxu0 0
    %121 = vmatpush1.bf16.msra.mxu0 0
    %122 = vmatprep.mubr.bf16.mxu0 0
    %123 = vmatmul.mubr.bf16.gmra.mrb[0].mxu0 %v88
    %v124 = vpop.f32.mrb[0].mxu0
    %v125 = vadd.f32 %v72, %v124
    %v126 = vpop.f32.mrb[0].mxu0
    %v127 = vpop.f32.mrb[0].mxu0
    %v128 = vpop.f32.mrb[0].mxu0
    %129 = vdwg.mxu0
    %v130 = vmax.f32 %v125, 0.0
    %v131 = vpack.c.bf16 %v130, %v130
    %v132 = vld [vmem:[#allocation7] sm:$0xf]
    %v133 = vld [vmem:[#allocation7 + $0x4] sm:$0xf]
    %v134 = vld [vmem:[#allocation7 + $0x8] sm:$0xf]
    %v135 = vld [vmem:[#allocation7 + $0xc] sm:$0xf]
    %v136 = vld [vmem:[#allocation7 + $0x10] sm:$0xf]
    %v137 = vld [vmem:[#allocation7 + $0x14] sm:$0xf]
    %v138 = vld [vmem:[#allocation7 + $0x18] sm:$0xf]
    %v139 = vld [vmem:[#allocation7 + $0x1c] sm:$0xf]
    %v140 = vld [vmem:[#allocation7 + $0x20] sm:$0xf]
    %v141 = vld [vmem:[#allocation7 + $0x24] sm:$0xf]
    %v142 = vld [vmem:[#allocation7 + $0x28] sm:$0xf]
    %v143 = vld [vmem:[#allocation7 + $0x2c] sm:$0xf]
    %v144 = vld [vmem:[#allocation7 + $0x30] sm:$0xf]
    %v145 = vld [vmem:[#allocation7 + $0x34] sm:$0xf]
    %v146 = vld [vmem:[#allocation7 + $0x38] sm:$0xf]
    %v147 = vld [vmem:[#allocation7 + $0x3c] sm:$0xf]
    %v148 = vld [vmem:[%s4] sm:$0x1]
    %v150 = vlaneseq
    %v151 = vshrl.u32 %v150, 7
    %v152 = vsub.s32 0, %v151
    %v153 = vrot.slane %v148, %v152
    %v171 = vunpack.c.l.b16 %v132
    %v172 = vunpack.c.l.b16 %v133
    %v173 = vunpack.c.l.b16 %v134
    %v174 = vunpack.c.l.b16 %v135
    %v175 = vunpack.c.l.b16 %v136
    %v176 = vunpack.c.l.b16 %v137
    %v177 = vunpack.c.l.b16 %v138
    %v178 = vunpack.c.l.b16 %v139
    %v179 = vunpack.c.l.b16 %v140
    %v180 = vunpack.c.l.b16 %v141
    %v181 = vunpack.c.l.b16 %v142
    %v182 = vunpack.c.l.b16 %v143
    %v183 = vunpack.c.l.b16 %v144
    %v184 = vunpack.c.l.b16 %v145
    %v185 = vunpack.c.l.b16 %v146
    %v186 = vunpack.c.l.b16 %v147
    %v187 = vpack.c.b16 %v172, %v171
    %v188 = vpack.c.b16 %v174, %v173
    %v189 = vpack.c.b16 %v176, %v175
    %v190 = vpack.c.b16 %v178, %v177
    %v191 = vpack.c.b16 %v180, %v179
    %v192 = vpack.c.b16 %v182, %v181
    %v193 = vpack.c.b16 %v184, %v183
    %v194 = vpack.c.b16 %v186, %v185
    %203 = vmatprep.subr.bf16.mxu0 0
    %204 = vmatpush1.bf16.msra.mxu0 %v187
    %205 = vmatprep.subr.bf16.mxu0 0
    %206 = vmatpush1.bf16.msra.mxu0 %v188
    %207 = vmatprep.subr.bf16.mxu0 0
    %208 = vmatpush1.bf16.msra.mxu0 %v189
    %209 = vmatprep.subr.bf16.mxu0 0
    %210 = vmatpush1.bf16.msra.mxu0 %v190
    %211 = vmatprep.subr.bf16.mxu0 0
    %212 = vmatpush1.bf16.msra.mxu0 %v191
    %213 = vmatprep.subr.bf16.mxu0 0
    %214 = vmatpush1.bf16.msra.mxu0 %v192
    %215 = vmatprep.subr.bf16.mxu0 0
    %216 = vmatpush1.bf16.msra.mxu0 %v193
    %217 = vmatprep.subr.bf16.mxu0 0
    %218 = vmatpush1.bf16.msra.mxu0 %v194
    %219 = vmatprep.subr.bf16.mxu0 0
    %220 = vmatpush1.bf16.msra.mxu0 0
    %221 = vmatprep.subr.bf16.mxu0 0
    %222 = vmatpush1.bf16.msra.mxu0 0
    %223 = vmatprep.subr.bf16.mxu0 0
    %224 = vmatpush1.bf16.msra.mxu0 0
    %225 = vmatprep.subr.bf16.mxu0 0
    %226 = vmatpush1.bf16.msra.mxu0 0
    %227 = vmatprep.subr.bf16.mxu0 0
    %228 = vmatpush1.bf16.msra.mxu0 0
    %229 = vmatprep.subr.bf16.mxu0 0
    %230 = vmatpush1.bf16.msra.mxu0 0
    %231 = vmatprep.subr.bf16.mxu0 0
    %232 = vmatpush1.bf16.msra.mxu0 0
    %233 = vmatprep.subr.bf16.mxu0 0
    %234 = vmatpush1.bf16.msra.mxu0 0
    %235 = vmatprep.mubr.bf16.mxu0 0
    %236 = vmatmul.mubr.bf16.gmra.mrb[0].mxu0 %v131
    %v237 = vpop.f32.mrb[0].mxu0
    %v238 = vadd.f32 %v153, %v237
    %v239 = vpop.f32.mrb[0].mxu0
    %v240 = vpop.f32.mrb[0].mxu0
    %v241 = vpop.f32.mrb[0].mxu0
    %242 = vdwg.mxu0
    %243 = vst [vmem:[#allocation8] sm:$0xff] %v238
    // Predicated region
    $region34: #{policy_head_apply.1} parent=1 // pred_check
      _
    $region35: #{policy_head_apply.1} parent=1 // pred_check_branch
      %245 = sbr.rel (0) target = $region37
    $region36: #{policy_head_apply.1} parent=1 // pred_region
      %s247 = ssub.s32 128, 128
      %248 = vsyncadd [#allocation4], %s247
      %s250 = sshll.u32 [#allocation8], 4
      %s251 = int_to_ptr.vmem [resolvable:$true] %s250
      %253 = dma.vmem_to_hbm [thread:$0]  %s251, 128, %s5, [#allocation4]
    $region37: #{policy_head_apply.1} parent=1 // pred_fallthru
      _
    // Predicated region
    $region38: #{policy_head_apply.1} parent=1 // pred_check
      _
    $region39: #{policy_head_apply.1} parent=1 // pred_check_branch
      %255 = sbr.rel (0) target = $region41
    $region40: #{policy_head_apply.1} parent=1 // pred_region
      %256 = dma.done [#allocation4], 128
    $region41: #{policy_head_apply.1} parent=1 // pred_fallthru
      _
    %257 = vsyncpa [#allocation3], 1
    %258 = vsyncpa [#allocation6], 1
    %259 = vsyncpa [#allocation4], 1

</llo_original>
